<compile_context>
chip_gen: v7x
topology: tpu7x:2x2x1
jax: 0.10.0
libtpu: 0.0.40
codegen_flags: <defaults>
</compile_context>

<pallas_src>
import functools

import jax
import jax.numpy as jnp
from jax import lax
from jax.experimental import pallas as pl
from jax.experimental.pallas import tpu as pltpu

_MiB = 1024 * 1024


def _vmem_capacity_bytes():
    try:
        return int(pltpu.get_tpu_info().vmem_capacity_bytes)
    except Exception:
        return 64 * _MiB  # conservative (v7x-sized) fallback


# --------------- fused path: whole activation resident in VMEM --------------

def _fused_kernel(x_ref, gamma_ref, beta_ref, alpha_ref, o_ref, *,
                  inv_count, eps):
    x = x_ref[...].astype(jnp.float32)                        # (N, C, HW)
    row_sum = jnp.sum(x, axis=2, keepdims=True)               # (N, C, 1)
    row_sq = jnp.sum(x * x, axis=2, keepdims=True)            # (N, C, 1)
    ch_sum = jnp.sum(row_sum, axis=0, keepdims=True)          # (1, C, 1)
    ch_sq = jnp.sum(row_sq, axis=0, keepdims=True)            # (1, C, 1)
    mean = ch_sum * inv_count
    var = jnp.maximum(ch_sq * inv_count - mean * mean, 0.0)   # biased (train BN)
    invstd = lax.rsqrt(var + eps)
    scale = gamma_ref[...] * invstd                           # (1, C, 1)
    shift = beta_ref[...] - mean * scale                      # (1, C, 1)
    y = x * scale + shift
    o_ref[...] = jnp.where(y >= 0, y, alpha_ref[...] * y).astype(o_ref.dtype)


def _fused_fits(N, C, HW, itemsize, vmem_cap):
    # VMEM footprint of the resident (N, C, HW) slab: last two dims are tiled
    # to (8, 128), so C < 8 and HW % 128 != 0 inflate the in-VMEM size.
    padded = N * (-(-C // 8) * 8) * (-(-HW // 128) * 128)
    # input block + output block (dtype) + ~3 f32 temporaries (x, x*x / y, cast)
    need = padded * (2 * itemsize + 12)
    if vmem_cap <= 80 * _MiB:
        # v7x-class: 64 MiB VMEM and the grid-less fused kernel runs on one
        # TensorCore while the tiled path megacore-splits -> keep the
        # crossover low (~8-16 MiB slabs).
        return (padded * itemsize <= 12 * _MiB) and (need <= vmem_cap - 24 * _MiB)
    # v5e / v6e: 128 MiB physical VMEM, leave ~24 MiB headroom.
    return need <= vmem_cap - 24 * _MiB


def _bn_prelu_fused(x3d, gamma, beta, alpha, eps, vmem_cap):
    N, C, HW = x3d.shape
    kern = functools.partial(_fused_kernel,
                             inv_count=1.0 / float(N * HW), eps=float(eps))
    g = gamma.astype(jnp.float32).reshape(1, C, 1)
    b = beta.astype(jnp.float32).reshape(1, C, 1)
    a = alpha.astype(jnp.float32).reshape(1, C, 1)
    return pl.pallas_call(
        kern,
        out_shape=jax.ShapeDtypeStruct((N, C, HW), x3d.dtype),
        compiler_params=pltpu.CompilerParams(
            vmem_limit_bytes=int(max(32 * _MiB, vmem_cap - 16 * _MiB))),
    )(x3d, g, b, a)


# --------------- tiled path: streaming over (N*C, H*W) ----------------------

def _stats_kernel(x_ref, stat_ref, *, hw, col_tile):
    # Partial sums over a (row_tile, col_tile) block, accumulated across the
    # column grid axis into a resident (row_tile, 2) output block.
    j = pl.program_id(1)

    @pl.when(j == 0)
    def _init():
        stat_ref[...] = jnp.zeros_like(stat_ref)

    x = x_ref[...].astype(jnp.float32)
    if hw % col_tile != 0:
        # Tail column tile carries padded (undefined) lanes: mask them out of
        # the reduction.  (Padded tail ROWS are harmless: per-row results for
        # out-of-range rows are discarded by the masked output store.)
        lane = lax.broadcasted_iota(jnp.int32, x.shape, 1) + j * col_tile
        x = jnp.where(lane < hw, x, 0.0)
    stat_ref[:, 0:1] += jnp.sum(x, axis=1, keepdims=True)
    stat_ref[:, 1:2] += jnp.sum(x * x, axis=1, keepdims=True)


def _apply_kernel(x_ref, p_ref, o_ref):
    # Folded BN affine + PReLU; p_ref packs (scale, shift, alpha) per row.
    x = x_ref[...].astype(jnp.float32)
    scale = p_ref[:, 0:1]
    shift = p_ref[:, 1:2]
    alpha = p_ref[:, 2:3]
    y = x * scale + shift
    o_ref[...] = jnp.where(y >= 0, y, alpha * y).astype(o_ref.dtype)


def _pick_tiles(M, HW, itemsize, target_bytes=4 * _MiB):
    """~4 MiB x-tiles; tile the lane axis too if a single row exceeds that."""
    row_bytes = HW * itemsize
    if row_bytes <= target_bytes:
        col_tile = HW                                   # full extent: legal
        rows = max(1, target_bytes // max(row_bytes, 1))
        rows = min(rows, M)
        if M >= 8:
            rows = max(8, (rows // 8) * 8)              # sublane-aligned
        else:
            rows = M                                    # tiny: full extent
        return rows, col_tile
    # One (n, c) plane is bigger than the target (huge H*W): tile lanes in
    # multiples of 128 so VMEM can't blow up on single-image big-HW inputs.
    rows = 8 if M >= 8 else M
    lanes = max(1, target_bytes // max(rows * itemsize, 1))
    col_tile = max(128, (lanes // 128) * 128)
    return rows, col_tile


def _bn_prelu_tiled(x2d, N, C, gamma, beta, alpha, eps,
                    row_tile=None, col_tile=None, vmem_cap=None):
    M, HW = x2d.shape                                   # M = N * C
    if vmem_cap is None:
        vmem_cap = _vmem_capacity_bytes()
    auto_r, auto_c = _pick_tiles(M, HW, x2d.dtype.itemsize)
    if row_tile is None:
        row_tile = auto_r
    if col_tile is None:
        col_tile = auto_c
    grid = (pl.cdiv(M, row_tile), pl.cdiv(HW, col_tile))
    # Explicit scoped-VMEM limit: covers double-buffered 4 MiB tiles on every
    # generation (also lifts v5e's 16 MiB default scoped limit).
    vmem_limit = int(min(vmem_cap // 2, 64 * _MiB))

    # Pass 1: per-row [sum, sum_sq] packed into one (M, 2) output.
    stats = pl.pallas_call(
        functools.partial(_stats_kernel, hw=HW, col_tile=col_tile),
        out_shape=jax.ShapeDtypeStruct((M, 2), jnp.float32),
        grid=grid,
        in_specs=[pl.BlockSpec((row_tile, col_tile), lambda i, j: (i, j))],
        out_specs=pl.BlockSpec((row_tile, 2), lambda i, j: (i, 0)),
        compiler_params=pltpu.CompilerParams(
            dimension_semantics=("parallel", "arbitrary"),
            vmem_limit_bytes=vmem_limit),
    )(x2d)

    # Tiny per-channel combine + affine fold in plain JAX (O(N*C) work).
    count = N * HW
    ch_sum = stats[:, 0].reshape(N, C).sum(axis=0)
    ch_sq = stats[:, 1].reshape(N, C).sum(axis=0)
    mean = ch_sum / count
    var = jnp.maximum(ch_sq / count - mean * mean, 0.0)  # biased (training BN)
    invstd = lax.rsqrt(var + eps)
    scale_c = gamma.astype(jnp.float32) * invstd
    shift_c = beta.astype(jnp.float32) - mean * scale_c
    # Per-row packed (scale, shift, alpha): row r = n*C + c -> channel c.
    params_c = jnp.stack([scale_c, shift_c, alpha.astype(jnp.float32)], axis=1)
    params_r = jnp.tile(params_c, (N, 1))                # (M, 3)

    # Pass 2: streaming normalize + PReLU (fully parallel grid).
    out2d = pl.pallas_call(
        _apply_kernel,
        out_shape=jax.ShapeDtypeStruct((M, HW), x2d.dtype),
        grid=grid,
        in_specs=[pl.BlockSpec((row_tile, col_tile), lambda i, j: (i, j)),
                  pl.BlockSpec((row_tile, 3), lambda i, j: (i, 0))],
        out_specs=pl.BlockSpec((row_tile, col_tile), lambda i, j: (i, j)),
        compiler_params=pltpu.CompilerParams(
            dimension_semantics=("parallel", "parallel"),
            vmem_limit_bytes=vmem_limit),
    )(x2d, params_r)
    return out2d


# --------------------------------- wrapper ----------------------------------

def bn_prelu(x_nchw, gamma, beta, alpha, *, eps=1e-3, force_tiled=False,
             row_tile=None, col_tile=None):
    """BatchNorm2d (training-mode batch stats, eps) + PReLU; NCHW in/out."""
    N, C, H, W = x_nchw.shape
    HW = H * W
    vmem_cap = _vmem_capacity_bytes()
    if (not force_tiled) and _fused_fits(N, C, HW, x_nchw.dtype.itemsize,
                                         vmem_cap):
        out = _bn_prelu_fused(x_nchw.reshape(N, C, HW), gamma, beta, alpha,
                              eps, vmem_cap)
        return out.reshape(N, C, H, W)
    out2d = _bn_prelu_tiled(x_nchw.reshape(N * C, HW), N, C,
                            gamma, beta, alpha, eps,
                            row_tile=row_tile, col_tile=col_tile,
                            vmem_cap=vmem_cap)
    return out2d.reshape(N, C, H, W)


def _reference(x_nchw, gamma, beta, alpha, eps=1e-3):
    """Pure-JAX reference matching PyTorch training-mode BN + PReLU."""
    x = x_nchw.astype(jnp.float32)
    mean = jnp.mean(x, axis=(0, 2, 3), keepdims=True)
    var = jnp.mean((x - mean) ** 2, axis=(0, 2, 3), keepdims=True)   # biased
    xhat = (x - mean) * lax.rsqrt(var + eps)
    y = xhat * gamma.reshape(1, -1, 1, 1) + beta.reshape(1, -1, 1, 1)
    a = alpha.reshape(1, -1, 1, 1)
    return jnp.where(y >= 0, y, a * y)


if __name__ == "__main__":
    key = jax.random.PRNGKey(0)

    def run_case(idx, shape, force_tiled, row_tile=None, col_tile=None):
        N, C, H, W = shape
        kx, kg, kb, ka = jax.random.split(jax.random.fold_in(key, idx), 4)
        x = jax.random.normal(kx, shape, dtype=jnp.float32)
        gamma = 1.0 + 0.1 * jax.random.normal(kg, (C,), dtype=jnp.float32)
        beta = 0.1 * jax.random.normal(kb, (C,), dtype=jnp.float32)
        alpha = 0.25 + 0.05 * jax.random.normal(ka, (C,), dtype=jnp.float32)
        out = jax.block_until_ready(
            bn_prelu(x, gamma, beta, alpha, force_tiled=force_tiled,
                     row_tile=row_tile, col_tile=col_tile))
        ref = _reference(x, gamma, beta, alpha)
        assert out.shape == shape
        assert jnp.allclose(out, ref, atol=2e-5, rtol=2e-5), (
            f"mismatch vs reference for shape={shape} "
            f"force_tiled={force_tiled} row_tile={row_tile} col_tile={col_tile}")

    # Spec-sized example (batch=2, channels=4, 16x16): fused single-pass path.
    run_case(0, (2, 4, 16, 16), force_tiled=False)
    # Same shape through the general tiled two-pass path (single column tile).
    run_case(1, (2, 4, 16, 16), force_tiled=True, row_tile=8)
    # Row count not a multiple of the tile: tail row tiles / masked stores.
    run_case(2, (3, 3, 16, 16), force_tiled=True, row_tile=8)
    # Column-tiled stats (HW split into two 128-lane tiles, exact division).
    run_case(3, (2, 4, 16, 16), force_tiled=True, row_tile=8, col_tile=128)
    # Column-tiled with a masked tail column tile (HW=192, col_tile=128).
    run_case(4, (2, 3, 16, 12), force_tiled=True, col_tile=128)

    print("KERNEL_OK")
</pallas_src>

<mosaic_0001>
module attributes {stable_mosaic.version = 11 : i64} {
  func.func @_fused_kernel(%arg0: memref<2x4x256xf32, #tpu.memory_space<vmem>>, %arg1: memref<1x4x1xf32, #tpu.memory_space<vmem>>, %arg2: memref<1x4x1xf32, #tpu.memory_space<vmem>>, %arg3: memref<1x4x1xf32, #tpu.memory_space<vmem>>, %arg4: memref<2x4x256xf32, #tpu.memory_space<vmem>>) attributes {dimension_semantics = [], scalar_prefetch = 0 : i64, scratch_operands = 0 : i64, tpu.core_type = #tpu.core_type<tc>} {
    %c0 = arith.constant 0 : index
    %c0_0 = arith.constant 0 : index
    %c0_1 = arith.constant 0 : index
    %0 = vector.load %arg0[%c0, %c0_0, %c0_1] : memref<2x4x256xf32, #tpu.memory_space<vmem>>, vector<2x4x256xf32>
    %cst = arith.constant dense<0.000000e+00> : vector<2x4xf32>
    %1 = vector.multi_reduction <add>, %0, %cst [2] : vector<2x4x256xf32> to vector<2x4xf32>
    %2 = vector.shape_cast %1 : vector<2x4xf32> to vector<2x4x1xf32>
    %3 = arith.mulf %0, %0 : vector<2x4x256xf32>
    %cst_2 = arith.constant dense<0.000000e+00> : vector<2x4xf32>
    %4 = vector.multi_reduction <add>, %3, %cst_2 [2] : vector<2x4x256xf32> to vector<2x4xf32>
    %5 = vector.shape_cast %4 : vector<2x4xf32> to vector<2x4x1xf32>
    %cst_3 = arith.constant dense<0.000000e+00> : vector<4x1xf32>
    %6 = vector.multi_reduction <add>, %2, %cst_3 [0] : vector<2x4x1xf32> to vector<4x1xf32>
    %7 = vector.shape_cast %6 : vector<4x1xf32> to vector<1x4x1xf32>
    %cst_4 = arith.constant dense<0.000000e+00> : vector<4x1xf32>
    %8 = vector.multi_reduction <add>, %5, %cst_4 [0] : vector<2x4x1xf32> to vector<4x1xf32>
    %9 = vector.shape_cast %8 : vector<4x1xf32> to vector<1x4x1xf32>
    %cst_5 = arith.constant 0.001953125 : f32
    %10 = vector.broadcast %cst_5 : f32 to vector<1x4x1xf32>
    %11 = arith.mulf %7, %10 : vector<1x4x1xf32>
    %cst_6 = arith.constant 0.001953125 : f32
    %12 = vector.broadcast %cst_6 : f32 to vector<1x4x1xf32>
    %13 = arith.mulf %9, %12 : vector<1x4x1xf32>
    %14 = arith.mulf %11, %11 : vector<1x4x1xf32>
    %15 = arith.subf %13, %14 : vector<1x4x1xf32>
    %cst_7 = arith.constant 0.000000e+00 : f32
    %16 = vector.broadcast %cst_7 : f32 to vector<1x4x1xf32>
    %17 = arith.maximumf %15, %16 : vector<1x4x1xf32>
    %cst_8 = arith.constant 1.000000e-03 : f32
    %18 = vector.broadcast %cst_8 : f32 to vector<1x4x1xf32>
    %19 = arith.addf %17, %18 : vector<1x4x1xf32>
    %20 = math.rsqrt %19 : vector<1x4x1xf32>
    %c0_9 = arith.constant 0 : index
    %c0_10 = arith.constant 0 : index
    %c0_11 = arith.constant 0 : index
    %21 = vector.load %arg1[%c0_9, %c0_10, %c0_11] : memref<1x4x1xf32, #tpu.memory_space<vmem>>, vector<1x4x1xf32>
    %22 = arith.mulf %21, %20 : vector<1x4x1xf32>
    %c0_12 = arith.constant 0 : index
    %c0_13 = arith.constant 0 : index
    %c0_14 = arith.constant 0 : index
    %23 = vector.load %arg2[%c0_12, %c0_13, %c0_14] : memref<1x4x1xf32, #tpu.memory_space<vmem>>, vector<1x4x1xf32>
    %24 = arith.mulf %11, %22 : vector<1x4x1xf32>
    %25 = arith.subf %23, %24 : vector<1x4x1xf32>
    %26 = vector.broadcast %22 : vector<1x4x1xf32> to vector<2x4x256xf32>
    %27 = arith.mulf %0, %26 : vector<2x4x256xf32>
    %28 = vector.broadcast %25 : vector<1x4x1xf32> to vector<2x4x256xf32>
    %29 = arith.addf %27, %28 : vector<2x4x256xf32>
    %cst_15 = arith.constant 0.000000e+00 : f32
    %30 = vector.broadcast %cst_15 : f32 to vector<2x4x256xf32>
    %31 = arith.cmpf oge, %29, %30 : vector<2x4x256xf32>
    %c0_16 = arith.constant 0 : index
    %c0_17 = arith.constant 0 : index
    %c0_18 = arith.constant 0 : index
    %32 = vector.load %arg3[%c0_16, %c0_17, %c0_18] : memref<1x4x1xf32, #tpu.memory_space<vmem>>, vector<1x4x1xf32>
    %33 = vector.broadcast %32 : vector<1x4x1xf32> to vector<2x4x256xf32>
    %34 = arith.mulf %33, %29 : vector<2x4x256xf32>
    %35 = arith.select %31, %29, %34 : vector<2x4x256xi1>, vector<2x4x256xf32>
    %c0_19 = arith.constant 0 : index
    %c0_20 = arith.constant 0 : index
    %c0_21 = arith.constant 0 : index
    %36 = vector.load %arg4[%c0_19, %c0_20, %c0_21] : memref<2x4x256xf32, #tpu.memory_space<vmem>>, vector<2x4x256xf32>
    tpu.vector_store %arg4[%c0_19, %c0_20, %c0_21], %35 {strides = array<i32>} : memref<2x4x256xf32, #tpu.memory_space<vmem>>, vector<2x4x256xf32>,
    return
  }
}

</mosaic_0001>

<llo_original>
// kernel: tpu_custom_call.1
$region0: #{tpu_custom_call.1}
  #allocation0 [shape = 'u32[]', space=smem, size = 0x4, offset = 0x4, fixed_abs, tag = 'smem constant byte address 0x4 - core index']
  #allocation1 [shape = 'u32[144,128]{1,0:T(1,128)}', space=vmem, size = 0x12000, scoped, tag = 'internal scratch']
  %s0 = inlined_call_operand.hbm [shape: f32[2,4,256], index: 0, kind: input, shape index: {}]
  %s1 = inlined_call_operand.vmem [shape: f32[1,4,1], index: 1, kind: input, shape index: {}]
  %s2 = inlined_call_operand.vmem [shape: f32[1,4,1], index: 2, kind: input, shape index: {}]
  %s3 = inlined_call_operand.vmem [shape: f32[1,4,1], index: 3, kind: input, shape index: {}]
  %s4 = inlined_call_operand.hbm [shape: f32[2,4,256], index: 4, kind: output, shape index: {}]
  %s5 = sld [smem:[#allocation0]]
  $region30: #{tpu_custom_call.1} parent=0
    _
  %s7 = ssub.s32 1, %s5
  %s8 = scalar_select 0, %s7, %s5
  $region1: #{tpu_custom_call.1} parent=0
    #allocation2 [shape = 'u8[8192]{0}', space=vmem, size = 0x2000, scoped, tag = 'input window, operand 0, single buffered']
    #allocation3 [shape = 's32[1]{0}', space=sflag, size = 0x4, scoped, tag = 'scoped memory for tpu_custom_call.1']
    #allocation4 [shape = 's32[1]{0}', space=sflag, size = 0x4, scoped, tag = 'scoped memory for tpu_custom_call.1']
    #allocation5 [shape = 'u8[8192]{0}', space=vmem, size = 0x2000, scoped, tag = 'output window, operand 0, single buffered']
    %9 = vsyncpa [#allocation3], 0
    %10 = vsyncpa [#allocation4], 0
    // Predicated region
    $region2: #{tpu_custom_call.1} parent=1 // pred_check
      _
    $region3: #{tpu_custom_call.1} parent=1 // pred_check_branch
      %12 = sbr.rel (0) target = $region5
    $region4: #{tpu_custom_call.1} parent=1 // pred_region
      %s14 = ssub.s32 256, 256
      %15 = vsyncadd [#allocation3], %s14
      %s16 = sshll.u32 [#allocation2], 4
      %s17 = int_to_ptr.vmem [resolvable:$true] %s16
      %22 = dma.hbm_to_vmem [thread:$0]  %s0, 256, %s17, [#allocation3], 128, 128, 8
    $region5: #{tpu_custom_call.1} parent=1 // pred_fallthru
      _
    // Predicated region
    $region6: #{tpu_custom_call.1} parent=1 // pred_check
      _
    $region7: #{tpu_custom_call.1} parent=1 // pred_check_branch
      %24 = sbr.rel (0) target = $region9
    $region8: #{tpu_custom_call.1} parent=1 // pred_region
      _
    $region9: #{tpu_custom_call.1} parent=1 // pred_fallthru
      _
    // Predicated region
    $region10: #{tpu_custom_call.1} parent=1 // pred_check
      _
    $region11: #{tpu_custom_call.1} parent=1 // pred_check_branch
      %26 = sbr.rel (0) target = $region13
    $region12: #{tpu_custom_call.1} parent=1 // pred_region
      _
    $region13: #{tpu_custom_call.1} parent=1 // pred_fallthru
      _
    // Predicated region
    $region14: #{tpu_custom_call.1} parent=1 // pred_check
      _
    $region15: #{tpu_custom_call.1} parent=1 // pred_check_branch
      %28 = sbr.rel (0) target = $region17
    $region16: #{tpu_custom_call.1} parent=1 // pred_region
      _
    $region17: #{tpu_custom_call.1} parent=1 // pred_fallthru
      _
    // Predicated region
    $region18: #{tpu_custom_call.1} parent=1 // pred_check
      _
    $region19: #{tpu_custom_call.1} parent=1 // pred_check_branch
      %30 = sbr.rel (0) target = $region21
    $region20: #{tpu_custom_call.1} parent=1 // pred_region
      %31 = dma.done [#allocation3], 256
    $region21: #{tpu_custom_call.1} parent=1 // pred_fallthru
      _
    %v32 = vld [vmem:[#allocation2] sm:$0xff]
    %v33 = vld [vmem:[#allocation2 + $0x8] sm:$0xff]
    %v36 = vcombine.high %v32, %v32
    %v37 = vcombine.high %v33, %v33
    %vm40 = vcmask 1043456
    %v41 = vsel %vm40, %v32, 0.0
    %v42 = vsel %vm40, %v36, 0.0
    %v43 = vadd.f32 %v41, %v42
    %44 = vadd.xlane.f32.xlu0 %v43
    %v45 = vpop.xlane.xlu0 %44
    %v46 = vsel %vm40, %v33, 0.0
    %v47 = vsel %vm40, %v37, 0.0
    %v48 = vadd.f32 %v46, %v47
    %49 = vadd.xlane.f32.xlu0 %v48
    %v50 = vpop.xlane.xlu0 %49
    %v51 = vmul.f32 %v32, %v32
    %v52 = vmul.f32 %v33, %v33
    %v55 = vcombine.high %v51, %v51
    %v56 = vcombine.high %v52, %v52
    %v59 = vsel %vm40, %v51, 0.0
    %v60 = vsel %vm40, %v55, 0.0
    %v61 = vadd.f32 %v59, %v60
    %62 = vadd.xlane.f32.xlu0 %v61
    %v63 = vpop.xlane.xlu0 %62
    %v64 = vsel %vm40, %v52, 0.0
    %v65 = vsel %vm40, %v56, 0.0
    %v66 = vadd.f32 %v64, %v65
    %67 = vadd.xlane.f32.xlu0 %v66
    %v68 = vpop.xlane.xlu0 %67
    %v69 = vsel %vm40, %v45, 0.0
    %v70 = vsel %vm40, %v50, 0.0
    %v71 = vadd.f32 %v69, %v70
    %v72 = vsel %vm40, %v63, 0.0
    %v73 = vsel %vm40, %v68, 0.0
    %v74 = vadd.f32 %v72, %v73
    %v75 = vmul.f32 %v71, 0.001953125
    %v76 = vmul.f32 %v74, 0.001953125
    %v77 = vmul.f32 %v75, %v75
    %v78 = vsub.f32 %v76, %v77
    %v79 = vmax.f32 %v78, 0.0
    %v80 = vadd.f32 %v79, 0.001
    %v81 = vrsqrt.pop %v80
    %v82 = vld [vmem:[%s1] sm:$0xf]
    %v83 = vmul.f32 %v82, %v81
    %v84 = vld [vmem:[%s2] sm:$0xf]
    %v85 = vmul.f32 %v75, %v83
    %v86 = vsub.f32 %v84, %v85
    %88 = vset.pattern.permute.xlu0 0
    %89 = vperm.xlu0 %88, %v83
    %v90 = vpop.permute.xlu0 %89
    %v92 = vunpack.c.l.s4 839922192
    %v93 = vunpack.c.0.s8 %v92
    %v94 = vlaneseq
    %v95 = vshrl.u32 %v94, 7
    %v96 = vsub.s32 %v93, %v95
    %v97 = vrot.slane %v90, %v96
    %v99 = vmul.f32 %v32, %v97
    %v100 = vmul.f32 %v33, %v97
    %102 = vset.pattern.permute.xlu0 0
    %103 = vperm.xlu0 %102, %v86
    %v104 = vpop.permute.xlu0 %103
    %v106 = vunpack.c.l.s4 839922192
    %v107 = vunpack.c.0.s8 %v106
    %v108 = vlaneseq
    %v109 = vshrl.u32 %v108, 7
    %v110 = vsub.s32 %v107, %v109
    %v111 = vrot.slane %v104, %v110
    %v113 = vadd.f32 %v99, %v111
    %v114 = vadd.f32 %v100, %v111
    %vm115 = vcmp.ge.f32.partialorder %v113, 0.0
    %vm116 = vcmp.ge.f32.partialorder %v114, 0.0
    %v117 = vld [vmem:[%s3] sm:$0xf]
    %119 = vset.pattern.permute.xlu0 0
    %120 = vperm.xlu0 %119, %v117
    %v121 = vpop.permute.xlu0 %120
    %v125 = vcombine.high %v113, %v113
    %v126 = vcombine.high %v114, %v114
    %v129 = vmul.f32 %v121, %v113
    %v130 = vmul.f32 %v121, %v125
    %v131 = vmul.f32 %v121, %v114
    %v132 = vmul.f32 %v121, %v126
    %v137 = vcombine.low %v129, %v130
    %v138 = vcombine.low %v131, %v132
    %v141 = vsel %vm115, %v113, %v137
    %v142 = vsel %vm116, %v114, %v138
    %143 = vst [vmem:[#allocation5] sm:$0xff] %v141
    %144 = vst [vmem:[#allocation5 + $0x8] sm:$0xff] %v142
    // Predicated region
    $region22: #{tpu_custom_call.1} parent=1 // pred_check
      _
    $region23: #{tpu_custom_call.1} parent=1 // pred_check_branch
      %146 = sbr.rel (0) target = $region25
    $region24: #{tpu_custom_call.1} parent=1 // pred_region
      %s148 = ssub.s32 256, 256
      %149 = vsyncadd [#allocation4], %s148
      %s150 = sshll.u32 [#allocation5], 4
      %s151 = int_to_ptr.vmem [resolvable:$true] %s150
      %156 = dma.vmem_to_hbm [thread:$0]  %s151, 256, %s4, [#allocation4], 128, 128, 8
    $region25: #{tpu_custom_call.1} parent=1 // pred_fallthru
      _
    // Predicated region
    $region26: #{tpu_custom_call.1} parent=1 // pred_check
      _
    $region27: #{tpu_custom_call.1} parent=1 // pred_check_branch
      %158 = sbr.rel (0) target = $region29
    $region28: #{tpu_custom_call.1} parent=1 // pred_region
      %159 = dma.done [#allocation4], 256
    $region29: #{tpu_custom_call.1} parent=1 // pred_fallthru
      _
    %160 = vsyncpa [#allocation3], 1
    %161 = vsyncpa [#allocation4], 1

</llo_original>
